<compile_context>
chip_gen: v6e
topology: v6e:2x2x1
jax: 0.10.0
libtpu: 0.0.40
codegen_flags: <defaults>
</compile_context>

<pallas_src>
import functools

import jax
import jax.numpy as jnp
from jax.experimental import pallas as pl
from jax.experimental.pallas import tpu as pltpu


# --------------------------------------------------------------------------- #
# Kernel
# --------------------------------------------------------------------------- #
def _logreg_kernel(x_ref, w_ref, b_ref, y_ref, logits_ref, perex_ref, *,
                   feat_dim, tile_k, num_k, mask_k, compute_dtype):
    """Grid = (batch tile i, feature tile k).

    Accumulates x_tile @ W_tile into the (VMEM-resident) f32 logits output
    block across k; at the last k step adds the bias and computes the
    per-example cross-entropy.
    """
    k = pl.program_id(1)

    @pl.when(k == 0)
    def _init():
        logits_ref[...] = jnp.zeros_like(logits_ref)

    x = x_ref[...].astype(compute_dtype)          # f32 -> bf16 cast on the VPU
    w = w_ref[...]                                # already compute_dtype

    if mask_k:
        # Ragged feature tail: zero both operands past the valid columns/rows
        # so garbage (possibly NaN) padding never reaches the accumulator.
        remaining = feat_dim - k * tile_k         # >= tile_k except on last step
        col = jax.lax.broadcasted_iota(jnp.int32, x.shape, 1)
        x = jnp.where(col < remaining, x, jnp.zeros_like(x))
        row = jax.lax.broadcasted_iota(jnp.int32, w.shape, 0)
        w = jnp.where(row < remaining, w, jnp.zeros_like(w))

    logits_ref[...] += jnp.dot(x, w, preferred_element_type=jnp.float32)

    @pl.when(k == num_k - 1)
    def _finish():
        logits = logits_ref[...] + b_ref[...]     # (tile_b, C) f32
        logits_ref[...] = logits

        # Numerically-stable log-sum-exp (no padded classes -> no masking).
        m = jnp.max(logits, axis=-1, keepdims=True)
        lse = m + jnp.log(jnp.sum(jnp.exp(logits - m), axis=-1, keepdims=True))

        cls = jax.lax.broadcasted_iota(jnp.int32, logits.shape, 1)
        true_logit = jnp.sum(jnp.where(cls == y_ref[...], logits, 0.0),
                             axis=-1, keepdims=True)
        perex_ref[...] = lse - true_logit         # per-example CE (tail rows discarded)


# --------------------------------------------------------------------------- #
# Tiling heuristics
# --------------------------------------------------------------------------- #
def _round_up(v, m):
    return ((v + m - 1) // m) * m


def _round_down(v, m):
    return (v // m) * m


def _vmem_budget_bytes():
    """Per-generation scoped VMEM limit: ~75% of physical capacity
    (48 MiB on v7x's 64 MiB/TC, capped at 96 MiB on v5e/v6e's 128 MiB)."""
    try:
        cap = pltpu.get_tpu_info().vmem_capacity_bytes
    except Exception:
        cap = 64 * 2**20                          # conservative (v7x) fallback
    return min((int(cap) * 3) // 4, 96 * 2**20)


def _choose_tiles(batch, feat_dim, num_class, x_itemsize, *, tile_b=None, tile_k=None):
    """Pick (tile_b, tile_k, vmem_limit) so that the double-buffered W slab,
    the streamed x/logits tiles and f32 temporaries fit the VMEM budget."""
    vmem_limit = _vmem_budget_bytes()
    budget = (vmem_limit * 3) // 4                # headroom for compiler scratch

    # --- feature (K) tiling: keep W resident when it fits, else split D. ----
    if tile_k is None:
        w_resident = 2 * feat_dim * num_class * 2          # double-buffered bf16 W
        if w_resident <= budget // 2:
            tile_k = feat_dim
        else:
            per_k_row = 2 * num_class * 2                   # bytes / K row of W tile
            tile_k = _round_down(max(budget // 4, per_k_row * 128) // per_k_row, 128)
            tile_k = max(128, min(tile_k, _round_up(feat_dim, 128)))
    if tile_k >= feat_dim:
        tile_k = feat_dim
    assert tile_k == feat_dim or tile_k % 128 == 0, "tile_k must be D or a multiple of 128"

    w_tile_bytes = 2 * tile_k * num_class * 2               # W tile, double-buffered
    remaining = max(budget - w_tile_bytes - 4 * num_class * 4, budget // 8)

    # --- batch tiling ---------------------------------------------------------
    if tile_b is None:
        per_row = (2 * tile_k * x_itemsize        # streamed x tile (double-buffered)
                   + tile_k * 2                   # in-kernel bf16 copy of the x tile
                   + 5 * num_class * 4            # logits out buffers + f32 temporaries
                   + 4 * 4 + 2 * 4)               # y tile + per-example CE
        tile_b = remaining // max(per_row, 1)
        tile_b = min(int(tile_b), 1024)                               # 512-1024 sweet spot
        tile_b = min(tile_b, _round_up(pl.cdiv(batch, 2), 8))         # >=2 tiles (megacore)
        tile_b = max(8, _round_down(tile_b, 8))
    assert tile_b % 8 == 0, "tile_b must be a multiple of 8"
    return int(tile_b), int(tile_k), int(vmem_limit)


# --------------------------------------------------------------------------- #
# Wrapper
# --------------------------------------------------------------------------- #
def logistic_regression_forward(x, w_t, b, y, *, compute_dtype=jnp.bfloat16,
                                tile_b=None, tile_k=None):
    """Pallas forward pass.

    x:(B,D) float, w_t:(D,C) pre-transposed nn.Linear weight, b:(C,), y:(B,) int.
    Returns (logits (B,C) f32, loss scalar f32) -- same semantics as the module.
    """
    B, D = x.shape
    D2, C = w_t.shape
    assert D2 == D
    assert y.shape == (B,)

    # One-time, tiny operand prep (D*C and C elements).  Callers in a training
    # loop can pre-convert w_t to compute_dtype to skip even this cast.
    w_c = w_t if w_t.dtype == compute_dtype else w_t.astype(compute_dtype)
    b_c = b.astype(jnp.float32).reshape(1, C)
    y_c = y.astype(jnp.int32).reshape(B, 1)

    tile_b, tile_k, vmem_limit = _choose_tiles(
        B, D, C, jnp.dtype(x.dtype).itemsize, tile_b=tile_b, tile_k=tile_k)
    nb = pl.cdiv(B, tile_b)
    nk = pl.cdiv(D, tile_k)
    mask_k = (D % tile_k) != 0

    kernel = functools.partial(
        _logreg_kernel, feat_dim=D, tile_k=tile_k, num_k=nk, mask_k=mask_k,
        compute_dtype=compute_dtype)

    logits, per_example = pl.pallas_call(
        kernel,
        out_shape=(
            jax.ShapeDtypeStruct((B, C), jnp.float32),   # logits, unpadded
            jax.ShapeDtypeStruct((B, 1), jnp.float32),   # per-example CE
        ),
        grid_spec=pltpu.PrefetchScalarGridSpec(
            num_scalar_prefetch=0,
            grid=(nb, nk),
            in_specs=[
                pl.BlockSpec((tile_b, tile_k), lambda i, k: (i, k)),   # x (streamed)
                pl.BlockSpec((tile_k, C), lambda i, k: (k, 0)),        # W tile / resident
                pl.BlockSpec((1, C), lambda i, k: (0, 0)),             # bias resident
                pl.BlockSpec((tile_b, 1), lambda i, k: (i, 0)),        # labels tile
            ],
            out_specs=(
                pl.BlockSpec((tile_b, C), lambda i, k: (i, 0)),        # logits (acc over k)
                pl.BlockSpec((tile_b, 1), lambda i, k: (i, 0)),
            ),
        ),
        compiler_params=pltpu.CompilerParams(
            dimension_semantics=("parallel", "arbitrary"),   # batch parallel, K reduction
            vmem_limit_bytes=vmem_limit,
        ),
    )(x, w_c, b_c, y_c)

    loss = jnp.mean(per_example)                  # mean over exactly B examples
    return logits, loss


# --------------------------------------------------------------------------- #
# Parameter init & pure-JAX reference
# --------------------------------------------------------------------------- #
def init_params(key, num_dim, num_class):
    """xavier_uniform_ weight (as in the PyTorch module), zero bias."""
    bound = (6.0 / (num_dim + num_class)) ** 0.5
    w = jax.random.uniform(key, (num_class, num_dim), jnp.float32, -bound, bound)
    return w.T, jnp.zeros((num_class,), jnp.float32)        # (D, C), (C,)


def reference_forward(x, w_t, b, y, compute_dtype=jnp.bfloat16):
    """Pure-JAX reference using the same bf16-input / f32-accumulate math."""
    logits = jnp.dot(x.astype(compute_dtype), w_t.astype(compute_dtype),
                     preferred_element_type=jnp.float32) + b[None, :].astype(jnp.float32)
    lse = jax.nn.logsumexp(logits, axis=-1)
    true_logit = jnp.take_along_axis(logits, y[:, None].astype(jnp.int32), axis=-1)[:, 0]
    return logits, jnp.mean(lse - true_logit)


# --------------------------------------------------------------------------- #
# Self-test
# --------------------------------------------------------------------------- #
if __name__ == "__main__":
    key = jax.random.PRNGKey(0)

    # --- Case 1: module-sized shapes, auto tiling, W resident, ragged batch. --
    num_dim, num_class, batch = 32, 8, 20
    k_w, k_x, k_y = jax.random.split(jax.random.fold_in(key, 1), 3)
    w_t, b = init_params(k_w, num_dim, num_class)
    x = jax.random.normal(k_x, (batch, num_dim), jnp.float32)
    y = jax.random.randint(k_y, (batch,), 0, num_class, jnp.int32)

    logits, loss = jax.block_until_ready(logistic_regression_forward(x, w_t, b, y))
    ref_logits, ref_loss = reference_forward(x, w_t, b, y)
    assert logits.shape == (batch, num_class)
    assert jnp.allclose(logits, ref_logits, atol=2e-3, rtol=2e-3), \
        float(jnp.max(jnp.abs(logits - ref_logits)))
    assert jnp.allclose(loss, ref_loss, atol=2e-3, rtol=2e-3), (float(loss), float(ref_loss))

    # --- Case 2: forces the K-split path (ragged D and B, C > 128 unpadded). --
    num_dim, num_class, batch = 300, 130, 100
    k_w, k_x, k_y = jax.random.split(jax.random.fold_in(key, 2), 3)
    w_t, b = init_params(k_w, num_dim, num_class)
    x = jax.random.normal(k_x, (batch, num_dim), jnp.float32)
    y = jax.random.randint(k_y, (batch,), 0, num_class, jnp.int32)

    logits, loss = jax.block_until_ready(
        logistic_regression_forward(x, w_t, b, y, tile_b=32, tile_k=128))
    ref_logits, ref_loss = reference_forward(x, w_t, b, y)
    assert jnp.allclose(logits, ref_logits, atol=2e-3, rtol=2e-3), \
        float(jnp.max(jnp.abs(logits - ref_logits)))
    assert jnp.allclose(loss, ref_loss, atol=2e-3, rtol=2e-3), (float(loss), float(ref_loss))

    print("KERNEL_OK")
</pallas_src>

<mosaic_0001>
module attributes {stable_mosaic.version = 11 : i64} {
  func.func @_logreg_kernel(%arg0: i32, %arg1: i32, %arg2: memref<16x32xf32, #tpu.memory_space<vmem>>, %arg3: memref<32x8xbf16, #tpu.memory_space<vmem>>, %arg4: memref<1x8xf32, #tpu.memory_space<vmem>>, %arg5: memref<16x1xi32, #tpu.memory_space<vmem>>, %arg6: memref<16x8xf32, #tpu.memory_space<vmem>>, %arg7: memref<16x1xf32, #tpu.memory_space<vmem>>) attributes {dimension_semantics = [#tpu.dimension_semantics<parallel>, #tpu.dimension_semantics<arbitrary>], iteration_bounds = array<i64: 2, 1>, scalar_prefetch = 0 : i64, scratch_operands = 0 : i64, tpu.core_type = #tpu.core_type<tc>, window_params = [{transform_indices = @transform_0, window_bounds = array<i64: 16, 32>}, {transform_indices = @transform_1, window_bounds = array<i64: 32, 8>}, {pipeline_mode = #tpu.pipeline_mode<synchronous>, transform_indices = @transform_2, window_bounds = array<i64: 1, 8>}, {transform_indices = @transform_3, window_bounds = array<i64: 16, 1>}, {transform_indices = @transform_4, window_bounds = array<i64: 16, 8>}, {transform_indices = @transform_5, window_bounds = array<i64: 16, 1>}]} {
    %c0_i32 = arith.constant 0 : i32
    %0 = arith.cmpi eq, %arg1, %c0_i32 : i32
    %1 = arith.extui %0 : i1 to i32
    %c0_i32_0 = arith.constant 0 : i32
    %2 = arith.cmpi ne, %1, %c0_i32_0 : i32
    scf.if %2 {
      %cst_10 = arith.constant 0.000000e+00 : f32
      %13 = vector.broadcast %cst_10 : f32 to vector<16x8xf32>
      %c0_11 = arith.constant 0 : index
      %c0_12 = arith.constant 0 : index
      %14 = vector.load %arg6[%c0_11, %c0_12] : memref<16x8xf32, #tpu.memory_space<vmem>>, vector<16x8xf32>
      tpu.vector_store %arg6[%c0_11, %c0_12], %13 {strides = array<i32>} : memref<16x8xf32, #tpu.memory_space<vmem>>, vector<16x8xf32>,
    } else {
    }
    %c0 = arith.constant 0 : index
    %c0_1 = arith.constant 0 : index
    %3 = vector.load %arg2[%c0, %c0_1] : memref<16x32xf32, #tpu.memory_space<vmem>>, vector<16x32xf32>
    %4 = arith.truncf %3 : vector<16x32xf32> to vector<16x32xbf16>
    %c0_2 = arith.constant 0 : index
    %c0_3 = arith.constant 0 : index
    %5 = vector.load %arg3[%c0_2, %c0_3] : memref<32x8xbf16, #tpu.memory_space<vmem>>, vector<32x8xbf16>
    %c0_4 = arith.constant 0 : index
    %c0_5 = arith.constant 0 : index
    %6 = vector.load %arg6[%c0_4, %c0_5] : memref<16x8xf32, #tpu.memory_space<vmem>>, vector<16x8xf32>
    %cst = arith.constant dense<0.000000e+00> : vector<16x8xf32>
    %7 = tpu.matmul %4, %5, %cst {dimension_numbers = #tpu.dot_dimension_numbers<[1], [0], [0], [1], [0, 0, 1, 1], [], []>} : vector<16x32xbf16>, vector<32x8xbf16>, vector<16x8xf32> -> vector<16x8xf32>
    %8 = arith.addf %6, %7 : vector<16x8xf32>
    %c0_6 = arith.constant 0 : index
    %c0_7 = arith.constant 0 : index
    %9 = vector.load %arg6[%c0_6, %c0_7] : memref<16x8xf32, #tpu.memory_space<vmem>>, vector<16x8xf32>
    tpu.vector_store %arg6[%c0_6, %c0_7], %8 {strides = array<i32>} : memref<16x8xf32, #tpu.memory_space<vmem>>, vector<16x8xf32>,
    %c0_i32_8 = arith.constant 0 : i32
    %10 = arith.cmpi eq, %arg1, %c0_i32_8 : i32
    %11 = arith.extui %10 : i1 to i32
    %c0_i32_9 = arith.constant 0 : i32
    %12 = arith.cmpi ne, %11, %c0_i32_9 : i32
    scf.if %12 {
      %c0_10 = arith.constant 0 : index
      %c0_11 = arith.constant 0 : index
      %13 = vector.load %arg6[%c0_10, %c0_11] : memref<16x8xf32, #tpu.memory_space<vmem>>, vector<16x8xf32>
      %c0_12 = arith.constant 0 : index
      %c0_13 = arith.constant 0 : index
      %14 = vector.load %arg4[%c0_12, %c0_13] : memref<1x8xf32, #tpu.memory_space<vmem>>, vector<1x8xf32>
      %15 = vector.broadcast %14 : vector<1x8xf32> to vector<16x8xf32>
      %16 = arith.addf %13, %15 : vector<16x8xf32>
      %c0_14 = arith.constant 0 : index
      %c0_15 = arith.constant 0 : index
      %17 = vector.load %arg6[%c0_14, %c0_15] : memref<16x8xf32, #tpu.memory_space<vmem>>, vector<16x8xf32>
      tpu.vector_store %arg6[%c0_14, %c0_15], %16 {strides = array<i32>} : memref<16x8xf32, #tpu.memory_space<vmem>>, vector<16x8xf32>,
      %cst_16 = arith.constant dense<0xFF800000> : vector<16xf32>
      %18 = vector.multi_reduction <maximumf>, %16, %cst_16 [1] : vector<16x8xf32> to vector<16xf32>
      %19 = vector.shape_cast %18 : vector<16xf32> to vector<16x1xf32>
      %20 = vector.broadcast %19 : vector<16x1xf32> to vector<16x8xf32>
      %21 = arith.subf %16, %20 : vector<16x8xf32>
      %22 = math.exp %21 : vector<16x8xf32>
      %cst_17 = arith.constant dense<0.000000e+00> : vector<16xf32>
      %23 = vector.multi_reduction <add>, %22, %cst_17 [1] : vector<16x8xf32> to vector<16xf32>
      %24 = vector.shape_cast %23 : vector<16xf32> to vector<16x1xf32>
      %25 = math.log %24 : vector<16x1xf32>
      %26 = arith.addf %19, %25 : vector<16x1xf32>
      %27 = tpu.iota {dimensions = array<i32: 1>} : vector<16x8xi32>
      %c0_18 = arith.constant 0 : index
      %c0_19 = arith.constant 0 : index
      %28 = vector.load %arg5[%c0_18, %c0_19] : memref<16x1xi32, #tpu.memory_space<vmem>>, vector<16x1xi32>
      %29 = vector.broadcast %28 : vector<16x1xi32> to vector<16x8xi32>
      %30 = arith.cmpi eq, %27, %29 : vector<16x8xi32>
      %cst_20 = arith.constant 0.000000e+00 : f32
      %31 = vector.broadcast %cst_20 : f32 to vector<16x8xf32>
      %32 = arith.select %30, %16, %31 : vector<16x8xi1>, vector<16x8xf32>
      %cst_21 = arith.constant dense<0.000000e+00> : vector<16xf32>
      %33 = vector.multi_reduction <add>, %32, %cst_21 [1] : vector<16x8xf32> to vector<16xf32>
      %34 = vector.shape_cast %33 : vector<16xf32> to vector<16x1xf32>
      %35 = arith.subf %26, %34 : vector<16x1xf32>
      %c0_22 = arith.constant 0 : index
      %c0_23 = arith.constant 0 : index
      %36 = vector.load %arg7[%c0_22, %c0_23] : memref<16x1xf32, #tpu.memory_space<vmem>>, vector<16x1xf32>
      tpu.vector_store %arg7[%c0_22, %c0_23], %35 {strides = array<i32>} : memref<16x1xf32, #tpu.memory_space<vmem>>, vector<16x1xf32>,
    } else {
    }
    return
  }
  func.func @transform_0(%arg0: i32, %arg1: i32) -> (i32, i32) {
    %c0_i32 = arith.constant 0 : i32
    return %arg0, %arg1 : i32, i32
  }
  func.func @transform_1(%arg0: i32, %arg1: i32) -> (i32, i32) {
    %c0_i32 = arith.constant 0 : i32
    %c0_i32_0 = arith.constant 0 : i32
    return %arg1, %c0_i32 : i32, i32
  }
  func.func @transform_2(%arg0: i32, %arg1: i32) -> (i32, i32) {
    %c0_i32 = arith.constant 0 : i32
    %c0_i32_0 = arith.constant 0 : i32
    %c0_i32_1 = arith.constant 0 : i32
    return %c0_i32, %c0_i32_0 : i32, i32
  }
  func.func @transform_3(%arg0: i32, %arg1: i32) -> (i32, i32) {
    %c0_i32 = arith.constant 0 : i32
    %c0_i32_0 = arith.constant 0 : i32
    return %arg0, %c0_i32 : i32, i32
  }
  func.func @transform_4(%arg0: i32, %arg1: i32) -> (i32, i32) {
    %c0_i32 = arith.constant 0 : i32
    %c0_i32_0 = arith.constant 0 : i32
    return %arg0, %c0_i32 : i32, i32
  }
  func.func @transform_5(%arg0: i32, %arg1: i32) -> (i32, i32) {
    %c0_i32 = arith.constant 0 : i32
    %c0_i32_0 = arith.constant 0 : i32
    return %arg0, %c0_i32 : i32, i32
  }
}

</mosaic_0001>

<llo_original>
// kernel: tpu_custom_call.1
$region0: #{tpu_custom_call.1}
  #allocation0 [shape = 'u32[]', space=smem, size = 0x4, offset = 0x4, fixed_abs, tag = 'smem constant byte address 0x4 - core index']
  #allocation1 [shape = 'u32[144,128]{1,0:T(1,128)}', space=vmem, size = 0x12000, scoped, tag = 'internal scratch']
  %s0 = inlined_call_operand.vmem [shape: f32[20,32], index: 0, kind: input, shape index: {}]
  %s1 = inlined_call_operand.vmem [shape: bf16[32,8], index: 1, kind: input, shape index: {}]
  %s2 = inlined_call_operand.vmem [shape: f32[1,8], index: 2, kind: input, shape index: {}]
  %s3 = inlined_call_operand.vmem [shape: s32[20,1], index: 3, kind: input, shape index: {}]
  %s4 = inlined_call_operand.vmem [shape: f32[20,8], index: 4, kind: output, shape index: {0}]
  %s5 = inlined_call_operand.vmem [shape: f32[20,1], index: 5, kind: output, shape index: {1}]
  %6 = xla_tuple %s4, %s5
  %s7 = sld [smem:[#allocation0]]
  $region161: #{tpu_custom_call.1} parent=0
    _
  %s9 = ssub.s32 1, %s7
  %s10 = scalar_select 0, %s9, %s7
  $region1: #{tpu_custom_call.1} parent=0
    #allocation2 [shape = 'u8[16384]{0}', space=vmem, size = 0x4000, scoped, tag = 'output window, operand 0']
    #allocation3 [shape = 'u8[16384]{0}', space=vmem, size = 0x4000, scoped, tag = 'output window, operand 1']
    loop: start=0, step=1, limit=4
    $region2: #{tpu_custom_call.1} parent=1 // loop_pre_header
      _
    $region3: #{tpu_custom_call.1} parent=1 // loop_header
      %s12 = sphi 0, %s16
      %p13 = scmp.ge.s32.totalorder %s12, 4
      %s19 = sphi 0, %s31
      %s20 = sphi 0, %s27
      %s21 = sphi 0, %s19
      %s22 = sphi 0, %s20
      %s23 = sphi 0, %s21
      %s24 = sphi 0, %s22
      %s36 = sphi 0, %s38
      %s39 = sphi 0, %s36
      %s40 = sphi 0, %s39
      %s56 = sphi 0, %s40
      %s62 = sphi 0, %s64
      %s65 = sphi 0, %s62
      %s66 = sphi 0, %s65
      %s82 = sphi 0, %s66
      %s86 = sphi 0, %s86
      %s88 = sphi 0, %s86
      %s89 = sphi 0, %s88
      %s103 = sphi 0, %s89
      %s109 = sphi 0, %s111
      %s112 = sphi 0, %s109
      %s113 = sphi 0, %s112
      %s129 = sphi 0, %s113
      %s135 = sphi 0, %s137
      %s138 = sphi 0, %s135
      %s139 = sphi 0, %s138
      %s155 = sphi 0, %s139
      %s161 = sphi 0, %s163
      %s164 = sphi 0, %s161
      %s165 = sphi 0, %s164
      %s181 = sphi 0, %s165
    $region4: #{tpu_custom_call.1} parent=1 // loop_header_branch
      %15 = sbr.rel (%p13) target = $region8
    $region5: #{tpu_custom_call.1} parent=1 // loop_body
      %s17 = ssub.s32 %s12, 1
      %s18 = ssub.s32 %s12, 2
      %s25 = sadd.s32 1, %s20
      %p26 = scmp.ge.s32.totalorder %s25, 1
      %s27 = scalar_select %p26, 0, %s25
      %s28 = sadd.s32 1, %s19
      %s29 = scalar_select %p26, %s28, %s19
      %p30 = scmp.ge.s32.totalorder %s29, 2
      %s31 = scalar_select %p30, 0, %s29
      %s32 = ssub.s32 %s19, %s31
      %s33 = ssub.s32 %s20, %s27
      %s34 = sor.u32 %s32, %s33
      %p35 = scmp.eq.s32.totalorder %s34, 0
      %s37 = sadd.s32 %s36, 1
      %s38 = scalar_select %p35, %s36, %s37
      %p41 = pneg %p35
      %p42 = scmp.eq.s32.totalorder %s12, 1
      %p43 = por %p41, %p42
      %p44 = scmp.ne.s32.totalorder %s36, %s39
      %p45 = scmp.eq.s32.totalorder %s12, 0
      %p46 = por %p44, %p45
      %p47 = scmp.ne.s32.totalorder %s36, %s39
      %p48 = scmp.eq.s32.totalorder %s17, 1
      %p49 = por %p47, %p48
      %p50 = scmp.ne.s32.totalorder %s39, %s40
      %p51 = scmp.eq.s32.totalorder %s17, 0
      %p52 = por %p50, %p51
      %p53 = scmp.ne.s32.totalorder %s39, %s40
      %p54 = scmp.eq.s32.totalorder %s18, 1
      %p55 = por %p53, %p54
      %p57 = scmp.ne.s32.totalorder %s40, %s56
      %p58 = scmp.eq.s32.totalorder %s18, 0
      %p59 = por %p57, %p58
      %s60 = ssub.s32 %s20, %s27
      %p61 = scmp.eq.s32.totalorder %s60, 0
      %s63 = sadd.s32 %s62, 1
      %s64 = scalar_select %p61, %s62, %s63
      %p67 = pneg %p61
      %p68 = scmp.eq.s32.totalorder %s12, 1
      %p69 = por %p67, %p68
      %p70 = scmp.ne.s32.totalorder %s62, %s65
      %p71 = scmp.eq.s32.totalorder %s12, 0
      %p72 = por %p70, %p71
      %p73 = scmp.ne.s32.totalorder %s62, %s65
      %p74 = scmp.eq.s32.totalorder %s17, 1
      %p75 = por %p73, %p74
      %p76 = scmp.ne.s32.totalorder %s65, %s66
      %p77 = scmp.eq.s32.totalorder %s17, 0
      %p78 = por %p76, %p77
      %p79 = scmp.ne.s32.totalorder %s65, %s66
      %p80 = scmp.eq.s32.totalorder %s18, 1
      %p81 = por %p79, %p80
      %p83 = scmp.ne.s32.totalorder %s66, %s82
      %p84 = scmp.eq.s32.totalorder %s18, 0
      %p85 = por %p83, %p84
      %s87 = sadd.s32 %s86, 1
      %p90 = scmp.eq.s32.totalorder %s12, 1
      %p91 = scmp.ne.s32.totalorder %s86, %s88
      %p92 = scmp.eq.s32.totalorder %s12, 0
      %p93 = por %p91, %p92
      %p94 = scmp.ne.s32.totalorder %s86, %s88
      %p95 = scmp.eq.s32.totalorder %s17, 1
      %p96 = por %p94, %p95
      %p97 = scmp.ne.s32.totalorder %s88, %s89
      %p98 = scmp.eq.s32.totalorder %s17, 0
      %p99 = por %p97, %p98
      %p100 = scmp.ne.s32.totalorder %s88, %s89
      %p101 = scmp.eq.s32.totalorder %s18, 1
      %p102 = por %p100, %p101
      %p104 = scmp.ne.s32.totalorder %s89, %s103
      %p105 = scmp.eq.s32.totalorder %s18, 0
      %p106 = por %p104, %p105
      %s107 = ssub.s32 %s19, %s31
      %p108 = scmp.eq.s32.totalorder %s107, 0
      %s110 = sadd.s32 %s109, 1
      %s111 = scalar_select %p108, %s109, %s110
      %p114 = pneg %p108
      %p115 = scmp.eq.s32.totalorder %s12, 1
      %p116 = por %p114, %p115
      %p117 = scmp.ne.s32.totalorder %s109, %s112
      %p118 = scmp.eq.s32.totalorder %s12, 0
      %p119 = por %p117, %p118
      %p120 = scmp.ne.s32.totalorder %s109, %s112
      %p121 = scmp.eq.s32.totalorder %s17, 1
      %p122 = por %p120, %p121
      %p123 = scmp.ne.s32.totalorder %s112, %s113
      %p124 = scmp.eq.s32.totalorder %s17, 0
      %p125 = por %p123, %p124
      %p126 = scmp.ne.s32.totalorder %s112, %s113
      %p127 = scmp.eq.s32.totalorder %s18, 1
      %p128 = por %p126, %p127
      %p130 = scmp.ne.s32.totalorder %s113, %s129
      %p131 = scmp.eq.s32.totalorder %s18, 0
      %p132 = por %p130, %p131
      %s133 = ssub.s32 %s19, %s31
      %p134 = scmp.eq.s32.totalorder %s133, 0
      %s136 = sadd.s32 %s135, 1
      %s137 = scalar_select %p134, %s135, %s136
      %p140 = pneg %p134
      %p141 = scmp.eq.s32.totalorder %s12, 1
      %p142 = por %p140, %p141
      %p143 = scmp.ne.s32.totalorder %s135, %s138
      %p144 = scmp.eq.s32.totalorder %s12, 0
      %p145 = por %p143, %p144
      %p146 = scmp.ne.s32.totalorder %s135, %s138
      %p147 = scmp.eq.s32.totalorder %s17, 1
      %p148 = por %p146, %p147
      %p149 = scmp.ne.s32.totalorder %s138, %s139
      %p150 = scmp.eq.s32.totalorder %s17, 0
      %p151 = por %p149, %p150
      %p152 = scmp.ne.s32.totalorder %s138, %s139
      %p153 = scmp.eq.s32.totalorder %s18, 1
      %p154 = por %p152, %p153
      %p156 = scmp.ne.s32.totalorder %s139, %s155
      %p157 = scmp.eq.s32.totalorder %s18, 0
      %p158 = por %p156, %p157
      %s159 = ssub.s32 %s19, %s31
      %p160 = scmp.eq.s32.totalorder %s159, 0
      %s162 = sadd.s32 %s161, 1
      %s163 = scalar_select %p160, %s161, %s162
      %p166 = pneg %p160
      %p167 = scmp.eq.s32.totalorder %s12, 1
      %p168 = por %p166, %p167
      %p169 = scmp.ne.s32.totalorder %s161, %s164
      %p170 = scmp.eq.s32.totalorder %s12, 0
      %p171 = por %p169, %p170
      %p172 = scmp.ne.s32.totalorder %s161, %s164
      %p173 = scmp.eq.s32.totalorder %s17, 1
      %p174 = por %p172, %p173
      %p175 = scmp.ne.s32.totalorder %s164, %s165
      %p176 = scmp.eq.s32.totalorder %s17, 0
      %p177 = por %p175, %p176
      %p178 = scmp.ne.s32.totalorder %s164, %s165
      %p179 = scmp.eq.s32.totalorder %s18, 1
      %p180 = por %p178, %p179
      %p182 = scmp.ne.s32.totalorder %s165, %s181
      %p183 = scmp.eq.s32.totalorder %s18, 0
      %p184 = por %p182, %p183
      %p185 = scmp.le.s32.totalorder 1, %s12
      %p186 = scmp.lt.s32.totalorder %s12, 3
      %p187 = pnand %p185, %p186
      %p188 = pneg %p187
      // Predicated region
      $region9: #{tpu_custom_call.1} parent=5 // pred_check
        _
      $region10: #{tpu_custom_call.1} parent=5 // pred_check_branch
        %190 = sbr.rel (%p187) target = $region12
      $region11: #{tpu_custom_call.1} parent=5 // pred_region
        %s191 = ssub.s32 %s12, 1
        // Predicated region
        $region13: #{tpu_custom_call.1} parent=11 // pred_check
          %p192 = pneg %p78
        $region14: #{tpu_custom_call.1} parent=11 // pred_check_branch
          %194 = sbr.rel (%p192) target = $region16
        $region15: #{tpu_custom_call.1} parent=11 // pred_region
          %s195 = smul.u32 4, %s22
          %p196 = scmp.lt.s32.totalorder %s195, 3
          %s197 = scalar_select %p196, %s195, 3
          %s198 = smul.addr %s197, 4
          %s199 = scalar_lea.vmem %s1, %s198
          %s200 = smul.u32 4, %s22
        $region16: #{tpu_custom_call.1} parent=11 // pred_fallthru
          _
        // Predicated region
        $region17: #{tpu_custom_call.1} parent=11 // pred_check
          %p201 = pneg %p99
        $region18: #{tpu_custom_call.1} parent=11 // pred_check_branch
          %203 = sbr.rel (%p201) target = $region20
        $region19: #{tpu_custom_call.1} parent=11 // pred_region
          _
        $region20: #{tpu_custom_call.1} parent=11 // pred_fallthru
          _
      $region12: #{tpu_custom_call.1} parent=5 // pred_fallthru
        _
      %p204 = scmp.lt.s32.totalorder %s12, 2
      // Predicated region
      $region21: #{tpu_custom_call.1} parent=5 // pred_check
        %p205 = pneg %p204
      $region22: #{tpu_custom_call.1} parent=5 // pred_check_branch
        %207 = sbr.rel (%p205) target = $region24
      $region23: #{tpu_custom_call.1} parent=5 // pred_region
        // Predicated region
        $region25: #{tpu_custom_call.1} parent=23 // pred_check
          %p208 = pneg %p46
        $region26: #{tpu_custom_call.1} parent=23 // pred_check_branch
          %210 = sbr.rel (%p208) target = $region28
        $region27: #{tpu_custom_call.1} parent=23 // pred_region
          %s211 = smul.u32 2, %s19
          %s212 = ssub.s32 3, %s211
          %p213 = scmp.lt.s32.totalorder %s212, 2
          %s214 = scalar_select %p213, %s212, 2
          %s215 = smul.u32 128, %s214
          %p216 = scmp.lt.s32.totalorder %s211, 2
          %s217 = scalar_select %p216, %s211, 2
          %p218 = scmp.lt.s32.totalorder %s20, 0
          %s219 = scalar_select %p218, %s20, 0
          %s220 = sadd.s32 %s219, %s217
          %s221 = smul.addr %s220, 8
          %s222 = scalar_lea.vmem %s0, %s221
          %s223 = smul.u32 2, %s19
          %s224 = ssub.s32 3, %s223
          %p225 = scmp.lt.s32.totalorder %s224, 2
          %s226 = scalar_select %p225, %s224, 2
          %s227 = smul.u32 128, %s226
        $region28: #{tpu_custom_call.1} parent=23 // pred_fallthru
          _
        // Predicated region
        $region29: #{tpu_custom_call.1} parent=23 // pred_check
          %p228 = pneg %p119
        $region30: #{tpu_custom_call.1} parent=23 // pred_check_branch
          %230 = sbr.rel (%p228) target = $region32
        $region31: #{tpu_custom_call.1} parent=23 // pred_region
          %s231 = smul.u32 2, %s19
          %s232 = ssub.s32 3, %s231
          %p233 = scmp.lt.s32.totalorder %s232, 2
          %s234 = scalar_select %p233, %s232, 2
          %s235 = smul.u32 128, %s234
          %p236 = scmp.lt.s32.totalorder %s231, 2
          %s237 = scalar_select %p236, %s231, 2
          %s238 = smul.addr %s237, 8
          %s239 = scalar_lea.vmem %s3, %s238
          %s240 = smul.u32 2, %s19
          %s241 = ssub.s32 3, %s240
          %p242 = scmp.lt.s32.totalorder %s241, 2
          %s243 = scalar_select %p242, %s241, 2
          %s244 = smul.u32 128, %s243
        $region32: #{tpu_custom_call.1} parent=23 // pred_fallthru
          _
      $region24: #{tpu_custom_call.1} parent=5 // pred_fallthru
        _
      %p245 = scmp.le.s32.totalorder 1, %s12
      %p246 = scmp.lt.s32.totalorder %s12, 3
      %p247 = pnand %p245, %p246
      %p248 = pneg %p247
      // Predicated region
      $region33: #{tpu_custom_call.1} parent=5 // pred_check
        _
      $region34: #{tpu_custom_call.1} parent=5 // pred_check_branch
        %250 = sbr.rel (%p247) target = $region36
      $region35: #{tpu_custom_call.1} parent=5 // pred_region
        %s251 = ssub.s32 %s12, 1
        %s252 = smul.u32 2, %s21
        %s253 = ssub.s32 3, %s252
        %p254 = scmp.lt.s32.totalorder %s253, 2
        %s255 = scalar_select %p254, %s253, 2
        %s256 = smul.u32 128, %s255
        %p257 = scmp.lt.s32.totalorder %s252, 2
        %s258 = scalar_select %p257, %s252, 2
        %p259 = scmp.lt.s32.totalorder %s22, 0
        %s260 = scalar_select %p259, %s22, 0
        %s261 = sadd.s32 %s260, %s258
        %s262 = smul.addr %s261, 8
        %s263 = scalar_lea.vmem %s0, %s262
        %p264 = pneg %p52
        %p265 = pneg %p49
        %s266 = smul.u32 4, %s22
        %p267 = scmp.lt.s32.totalorder %s266, 3
        %s268 = scalar_select %p267, %s266, 3
        %s269 = smul.addr %s268, 4
        %s270 = scalar_lea.vmem %s1, %s269
        %p271 = pneg %p78
        %p272 = pneg %p75
        %p273 = pneg %p99
        %p274 = pneg %p96
        %s275 = smul.u32 2, %s21
        %s276 = ssub.s32 3, %s275
        %p277 = scmp.lt.s32.totalorder %s276, 2
        %s278 = scalar_select %p277, %s276, 2
        %s279 = smul.u32 128, %s278
        %p280 = scmp.lt.s32.totalorder %s275, 2
        %s281 = scalar_select %p280, %s275, 2
        %s282 = smul.addr %s281, 8
        %s283 = scalar_lea.vmem %s3, %s282
        %p284 = pneg %p125
        %p285 = pneg %p122
        %p286 = pneg %p151
        %p287 = pneg %p148
        %s288 = sand.u32 %s138, 1
        %s289 = sand.u32 %s138, 1
        %s290 = smul.addr %s289, 16
        %s291 = scalar_lea.vmem [#allocation2], %s290
        %p292 = pneg %p177
        %p293 = pneg %p174
        %s294 = sand.u32 %s164, 1
        %s295 = sand.u32 %s164, 1
        %s296 = smul.addr %s295, 16
        %s297 = scalar_lea.vmem [#allocation3], %s296
        %s298 = smul.u32 2, %s21
        %s299 = ssub.s32 3, %s298
        %p300 = scmp.lt.s32.totalorder %s299, 2
        %s301 = scalar_select %p300, %s299, 2
        %s302 = smul.u32 128, %s301
        %p303 = scmp.lt.s32.totalorder %s298, 2
        %s304 = scalar_select %p303, %s298, 2
        %p305 = scmp.lt.s32.totalorder %s22, 0
        %s306 = scalar_select %p305, %s22, 0
        %s307 = sadd.s32 %s306, %s304
        %s308 = smul.addr %s307, 8
        %s309 = scalar_lea.vmem %s0, %s308
        %s310 = smul.u32 2, %s21
        %s311 = ssub.s32 3, %s310
        %p312 = scmp.lt.s32.totalorder %s311, 2
        %s313 = scalar_select %p312, %s311, 2
        %s314 = smul.u32 128, %s313
        %s315 = smul.u32 4, %s22
        %p316 = scmp.lt.s32.totalorder %s315, 3
        %s317 = scalar_select %p316, %s315, 3
        %s318 = smul.addr %s317, 4
        %s319 = scalar_lea.vmem %s1, %s318
        %s320 = smul.u32 4, %s22
        %s321 = smul.u32 2, %s21
        %s322 = ssub.s32 3, %s321
        %p323 = scmp.lt.s32.totalorder %s322, 2
        %s324 = scalar_select %p323, %s322, 2
        %s325 = smul.u32 128, %s324
        %p326 = scmp.lt.s32.totalorder %s321, 2
        %s327 = scalar_select %p326, %s321, 2
        %s328 = smul.addr %s327, 8
        %s329 = scalar_lea.vmem %s3, %s328
        %s330 = smul.u32 2, %s21
        %s331 = ssub.s32 3, %s330
        %p332 = scmp.lt.s32.totalorder %s331, 2
        %s333 = scalar_select %p332, %s331, 2
        %s334 = smul.u32 128, %s333
        %s335 = smul.u32 2, %s21
        %s336 = ssub.s32 3, %s335
        %p337 = scmp.lt.s32.totalorder %s336, 2
        %s338 = scalar_select %p337, %s336, 2
        %s339 = smul.u32 128, %s338
        %s340 = smul.u32 2, %s21
        %s341 = ssub.s32 3, %s340
        %p342 = scmp.lt.s32.totalorder %s341, 2
        %s343 = scalar_select %p342, %s341, 2
        %s344 = smul.u32 128, %s343
        %p346 = scmp.eq.s32.totalorder %s22, 0
        // Predicated region
        $region37: #{tpu_custom_call.1} parent=35 // pred_check
          %p347 = pneg %p346
        $region38: #{tpu_custom_call.1} parent=35 // pred_check_branch
          %349 = sbr.rel (%p347) target = $region40
        $region39: #{tpu_custom_call.1} parent=35 // pred_region
          %vm350 = vcmask 64512
          %351 = vst.msk [vmem:[%s291] sm:$0xff] %vm350, 0.0
          %352 = vst.msk [vmem:[%s291 + $0x8] sm:$0xff] %vm350, 0.0
        $region40: #{tpu_custom_call.1} parent=35 // pred_fallthru
          _
        %v353 = vld [vmem:[%s309] sm:$0xff]
        %v354 = vld [vmem:[%s309 + $0x8] sm:$0xff]
        %v355 = vpack.c.bf16 %v354, %v353
        %v356 = vld [vmem:[%s319] sm:$0xf]
        %v357 = vld [vmem:[%s319 + $0x4] sm:$0xf]
        %v358 = vld [vmem:[%s319 + $0x8] sm:$0xf]
        %v359 = vld [vmem:[%s319 + $0xc] sm:$0xf]
        %v360 = vld [vmem:[%s291] sm:$0xff]
        %v361 = vld [vmem:[%s291 + $0x8] sm:$0xff]
        %v366 = vunpack.c.l.b16 %v356
        %v367 = vunpack.c.l.b16 %v357
        %v368 = vunpack.c.l.b16 %v358
        %v369 = vunpack.c.l.b16 %v359
        %v370 = vpack.c.b16 %v367, %v366
        %v371 = vpack.c.b16 %v369, %v368
        %vm374 = vcmask 261120
        %v376 = vsel %vm374, %v355, 0
        %378 = vmatprep.subr.bf16.mxu0 0
        %379 = vmatpush1.bf16.msra.mxu0 0
        %380 = vmatprep.subr.bf16.mxu0 0
        %381 = vmatpush1.bf16.msra.mxu0 0
        %382 = vmatprep.subr.bf16.mxu0 0
        %383 = vmatpush1.bf16.msra.mxu0 0
        %384 = vmatprep.subr.bf16.mxu0 0
        %385 = vmatpush1.bf16.msra.mxu0 0
        %386 = vmatprep.subr.bf16.mxu0 0
        %387 = vmatpush1.bf16.msra.mxu0 0
        %388 = vmatprep.subr.bf16.mxu0 0
        %389 = vmatpush1.bf16.msra.mxu0 0
        %390 = vmatprep.subr.bf16.mxu0 0
        %391 = vmatpush1.bf16.msra.mxu0 %v371
        %392 = vmatprep.subr.bf16.mxu0 0
        %393 = vmatpush1.bf16.msra.mxu0 %v370
        %394 = vmatprep.subr.bf16.mxu0 0
        %395 = vmatpush2.bf16.msra.mxu0 0
        %396 = vmatprep.subr.bf16.mxu0 0
        %397 = vmatpush2.bf16.msra.mxu0 0
        %398 = vmatprep.subr.bf16.mxu0 0
        %399 = vmatpush2.bf16.msra.mxu0 0
        %400 = vmatprep.subr.bf16.mxu0 0
        %401 = vmatpush2.bf16.msra.mxu0 0
        %402 = vmatprep.subr.bf16.mxu0 0
        %403 = vmatpush2.bf16.msra.mxu0 0
        %404 = vmatprep.subr.bf16.mxu0 0
        %405 = vmatpush2.bf16.msra.mxu0 0
        %406 = vmatprep.subr.bf16.mxu0 0
        %407 = vmatpush2.bf16.msra.mxu0 0
        %408 = vmatprep.subr.bf16.mxu0 0
        %409 = vmatpush2.bf16.msra.mxu0 0
        %410 = vmatprep.mubr.bf16.mxu0 0
        %411 = vmatmul.mubr.bf16.gmra.mxu0 %v376
        %v412 = vpop.f32.mrf.mxu0
        %v413 = vadd.f32 0.0, %v412
        %v414 = vpop.f32.mrf.mxu0
        %v415 = vpop.f32.mrf.mxu0
        %v416 = vadd.f32 0.0, %v415
        %v417 = vpop.f32.mrf.mxu0
        %418 = vdwg.mxu0
        %v419 = vadd.f32 %v360, %v413
        %v420 = vadd.f32 %v361, %v416
        %vm421 = vcmask 64512
        %422 = vst.msk [vmem:[%s291] sm:$0xff] %vm421, %v419
        %423 = vst.msk [vmem:[%s291 + $0x8] sm:$0xff] %vm421, %v420
        // Predicated region
        $region41: #{tpu_custom_call.1} parent=35 // pred_check
          %p424 = pneg %p346
        $region42: #{tpu_custom_call.1} parent=35 // pred_check_branch
          %426 = sbr.rel (%p424) target = $region44
        $region43: #{tpu_custom_call.1} parent=35 // pred_region
          %v427 = vld [vmem:[%s291] sm:$0xff]
          %v428 = vld [vmem:[%s291 + $0x8] sm:$0xff]
          %v429 = vld [vmem:[%s2] sm:$0x1]
          %v431 = vlaneseq
          %v432 = vshrl.u32 %v431, 7
          %v433 = vsub.s32 0, %v432
          %v434 = vrot.slane %v429, %v433
          %v436 = vadd.f32 %v427, %v434
          %v437 = vadd.f32 %v428, %v434
          %438 = vst.msk [vmem:[%s291] sm:$0xff] %vm421, %v436
          %439 = vst.msk [vmem:[%s291 + $0x8] sm:$0xff] %vm421, %v437
          %v440 = vsel %vm421, %v436, -inf
          %441 = vmax.xlane.f32.xlu0 %v440
          %v442 = vpop.xlane.xlu0 %441
          %v443 = vsel %vm421, %v437, -inf
          %444 = vmax.xlane.f32.xlu0 %v443
          %v445 = vpop.xlane.xlu0 %444
          %v446 = vsub.f32 %v436, %v442
          %v447 = vsub.f32 %v437, %v445
          %v448 = vmul.f32 %v446, 1.442695
          %v449 = vpow.pop %v448
          %v450 = vmul.f32 %v447, 1.442695
          %v451 = vpow.pop %v450
          %v452 = vsel %vm421, %v449, 0.0
          %453 = vadd.xlane.f32.xlu0 %v452
          %v454 = vpop.xlane.xlu0 %453
          %v455 = vsel %vm421, %v451, 0.0
          %456 = vadd.xlane.f32.xlu0 %v455
          %v457 = vpop.xlane.xlu0 %456
          %v458 = vlog2.pop %v454
          %v459 = vmul.f32 %v458, 0.6931472
          %v460 = vlog2.pop %v457
          %v461 = vmul.f32 %v460, 0.6931472
          %v462 = vadd.f32 %v442, %v459
          %v463 = vadd.f32 %v445, %v461
          %v464 = vlaneseq
          %v465 = vand.u32 %v464, 127
          %v466 = vld [vmem:[%s329] sm:$0xff]
          %v467 = vld [vmem:[%s329 + $0x8] sm:$0xff]
          %468 = vset.pattern.permute.xlu0 0
          %469 = vperm.xlu0 %468, %v466
          %v470 = vpop.permute.xlu0 %469
          %471 = vset.pattern.permute.xlu0 0
          %472 = vperm.xlu0 %471, %v467
          %v473 = vpop.permute.xlu0 %472
          %vm474 = vcmp.eq.s32.totalorder %v465, %v470
          %vm475 = vcmp.eq.s32.totalorder %v465, %v473
          %v476 = vsel %vm474, %v436, 0.0
          %v477 = vsel %vm475, %v437, 0.0
          %v478 = vsel %vm421, %v476, 0.0
          %479 = vadd.xlane.f32.xlu0 %v478
          %v480 = vpop.xlane.xlu0 %479
          %v481 = vsel %vm421, %v477, 0.0
          %482 = vadd.xlane.f32.xlu0 %v481
          %v483 = vpop.xlane.xlu0 %482
          %v484 = vsub.f32 %v462, %v480
          %v485 = vsub.f32 %v463, %v483
          %vm486 = vcmask 7168
          %487 = vst.msk [vmem:[%s297] sm:$0xff] %vm486, %v484
          %488 = vst.msk [vmem:[%s297 + $0x8] sm:$0xff] %vm486, %v485
        $region44: #{tpu_custom_call.1} parent=35 // pred_fallthru
          _
        %s489 = sand.u32 %s138, 1
        %s490 = sand.u32 %s138, 1
        %s491 = smul.addr %s490, 16
        %s492 = scalar_lea.vmem [#allocation2], %s491
        %s493 = sand.u32 %s164, 1
        %s494 = sand.u32 %s164, 1
        %s495 = smul.addr %s494, 16
        %s496 = scalar_lea.vmem [#allocation3], %s495
        // Predicated region
        $region45: #{tpu_custom_call.1} parent=35 // pred_check
          %p497 = pneg %p148
        $region46: #{tpu_custom_call.1} parent=35 // pred_check_branch
          %499 = sbr.rel (%p497) target = $region48
        $region47: #{tpu_custom_call.1} parent=35 // pred_region
          %s500 = smul.u32 2, %s21
          %s501 = ssub.s32 3, %s500
          %p502 = scmp.lt.s32.totalorder %s501, 2
          %s503 = scalar_select %p502, %s501, 2
          %s504 = smul.u32 128, %s503
          %p505 = scmp.ne.s32.totalorder 0, %s504
          %s506 = smul.addr %s500, 8
          %s507 = scalar_lea.vmem %s4, %s506
          // Predicated region
          $region49: #{tpu_custom_call.1} parent=47 // pred_check
            %p508 = pneg %p505
          $region50: #{tpu_custom_call.1} parent=47 // pred_check_branch
            %510 = sbr.rel (%p508) target = $region52
          $region51: #{tpu_custom_call.1} parent=47 // pred_region
            // Predicated region
            $region53: #{tpu_custom_call.1} parent=51 // pred_check
              _
            $region54: #{tpu_custom_call.1} parent=51 // pred_check_branch
              %512 = sbr.rel (0) target = $region56
            $region55: #{tpu_custom_call.1} parent=51 // pred_region
              // Predicated region
              $region75: #{tpu_custom_call.1} parent=55 // pred_check
                _
              $region76: #{tpu_custom_call.1} parent=55 // pred_check_branch
                %564 = sbr.rel (0) target = $region78
              $region77: #{tpu_custom_call.1} parent=55 // pred_region
                %s565 = sshrl.u32 %s503, 1
                // While loop
                $region79: #{tpu_custom_call.1} parent=77 // loop_pre_header
                  _
                $region80: #{tpu_custom_call.1} parent=77 // loop_header
                  %s567 = sphi 0, %s569
                  %p568 = scmp.ge.s32.totalorder %s567, %s565
                  %s572 = sphi 0, %s581
                  %s573 = sphi %s492, %s584
                  %s574 = sphi %s507, %s585
                $region81: #{tpu_custom_call.1} parent=77 // loop_header_branch
                  %571 = sbr.rel (%p568) target = $region85
                $region82: #{tpu_custom_call.1} parent=77 // loop_body
                  %v575 = vld [vmem:[%s573] sm:$0xff]
                  %576 = vst [vmem:[%s574] sm:$0xff] %v575
                  %v577 = vld [vmem:[%s573 + $0x8] sm:$0xff]
                  %578 = vst [vmem:[%s574 + $0x8] sm:$0xff] %v577
                  %s579 = sadd.s32 1, %s572
                  %p580 = scmp.ge.s32.totalorder %s579, %s565
                  %s581 = scalar_select %p580, 0, %s579
                  %s582 = smul.u32 %s581, 16
                  %s583 = smul.u32 %s581, 16
                  %s584 = scalar_lea.vmem %s492, %s582 [#allocation2]
                  %s585 = scalar_lea.vmem %s507, %s583
                $region83: #{tpu_custom_call.1} parent=77 // loop_footer
                  %s569 = sadd.s32 %s567, 1
                $region84: #{tpu_custom_call.1} parent=77 // loop_footer_branch
                  %566 = sbr.rel target = $region80
                $region85: #{tpu_custom_call.1} parent=77 // loop_exit
                  _
                %s586 = sshrl.u32 %s503, 1
                %s587 = sand.u32 %s503, 1
                %s588 = smul.u32 %s586, 2
                %s589 = smul.u32 8, %s588
                %s590 = scalar_lea.vmem %s492, %s589 [#allocation2]
                %s591 = smul.u32 8, %s588
                %s592 = scalar_lea.vmem %s507, %s591
                // While loop
                $region86: #{tpu_custom_call.1} parent=77 // loop_pre_header
                  _
                $region87: #{tpu_custom_call.1} parent=77 // loop_header
                  %s594 = sphi 0, %s596
                  %p595 = scmp.ge.s32.totalorder %s594, %s587
                  %s599 = sphi 0, %s606
                  %s600 = sphi %s590, %s609
                  %s601 = sphi %s592, %s610
                $region88: #{tpu_custom_call.1} parent=77 // loop_header_branch
                  %598 = sbr.rel (%p595) target = $region92
                $region89: #{tpu_custom_call.1} parent=77 // loop_body
                  %v602 = vld [vmem:[%s600] sm:$0xff]
                  %603 = vst [vmem:[%s601] sm:$0xff] %v602
                  %s604 = sadd.s32 1, %s599
                  %p605 = scmp.ge.s32.totalorder %s604, %s587
                  %s606 = scalar_select %p605, 0, %s604
                  %s607 = smul.u32 %s606, 8
                  %s608 = smul.u32 %s606, 8
                  %s609 = scalar_lea.vmem %s590, %s607 [#allocation2]
                  %s610 = scalar_lea.vmem %s592, %s608
                $region90: #{tpu_custom_call.1} parent=77 // loop_footer
                  %s596 = sadd.s32 %s594, 1
                $region91: #{tpu_custom_call.1} parent=77 // loop_footer_branch
                  %593 = sbr.rel target = $region87
                $region92: #{tpu_custom_call.1} parent=77 // loop_exit
                  _
              $region78: #{tpu_custom_call.1} parent=55 // pred_fallthru
                _
              // Predicated region
              $region93: #{tpu_custom_call.1} parent=55 // pred_check
                _
              $region94: #{tpu_custom_call.1} parent=55 // pred_check_branch
                %612 = sbr.rel target = $region96
              $region95: #{tpu_custom_call.1} parent=55 // pred_region
                _
              $region96: #{tpu_custom_call.1} parent=55 // pred_fallthru
                _
            $region56: #{tpu_custom_call.1} parent=51 // pred_fallthru
              _
            // Predicated region
            $region57: #{tpu_custom_call.1} parent=51 // pred_check
              _
            $region58: #{tpu_custom_call.1} parent=51 // pred_check_branch
              %514 = sbr.rel target = $region60
            $region59: #{tpu_custom_call.1} parent=51 // pred_region
              %s516 = ssub.s32 256, 1
              %s517 = sshrl.u32 %s503, 1
              // While loop
              $region61: #{tpu_custom_call.1} parent=59 // loop_pre_header
                _
              $region62: #{tpu_custom_call.1} parent=59 // loop_header
                %s519 = sphi 0, %s521
                %p520 = scmp.ge.s32.totalorder %s519, %s517
                %s524 = sphi 0, %s533
                %s525 = sphi %s492, %s536
                %s526 = sphi %s507, %s537
              $region63: #{tpu_custom_call.1} parent=59 // loop_header_branch
                %523 = sbr.rel (%p520) target = $region67
              $region64: #{tpu_custom_call.1} parent=59 // loop_body
                %v527 = vld [vmem:[%s525] sm:%s516]
                %528 = vst [vmem:[%s526] sm:%s516] %v527
                %v529 = vld [vmem:[%s525 + $0x8] sm:%s516]
                %530 = vst [vmem:[%s526 + $0x8] sm:%s516] %v529
                %s531 = sadd.s32 1, %s524
                %p532 = scmp.ge.s32.totalorder %s531, %s517
                %s533 = scalar_select %p532, 0, %s531
                %s534 = smul.u32 %s533, 16
                %s535 = smul.u32 %s533, 16
                %s536 = scalar_lea.vmem %s492, %s534 [#allocation2]
                %s537 = scalar_lea.vmem %s507, %s535
              $region65: #{tpu_custom_call.1} parent=59 // loop_footer
                %s521 = sadd.s32 %s519, 1
              $region66: #{tpu_custom_call.1} parent=59 // loop_footer_branch
                %518 = sbr.rel target = $region62
              $region67: #{tpu_custom_call.1} parent=59 // loop_exit
                _
              %s538 = sshrl.u32 %s503, 1
              %s539 = sand.u32 %s503, 1
              %s540 = smul.u32 %s538, 2
              %s541 = smul.u32 8, %s540
              %s542 = scalar_lea.vmem %s492, %s541 [#allocation2]
              %s543 = smul.u32 8, %s540
              %s544 = scalar_lea.vmem %s507, %s543
              // While loop
              $region68: #{tpu_custom_call.1} parent=59 // loop_pre_header
                _
              $region69: #{tpu_custom_call.1} parent=59 // loop_header
                %s546 = sphi 0, %s548
                %p547 = scmp.ge.s32.totalorder %s546, %s539
                %s551 = sphi 0, %s558
                %s552 = sphi %s542, %s561
                %s553 = sphi %s544, %s562
              $region70: #{tpu_custom_call.1} parent=59 // loop_header_branch
                %550 = sbr.rel (%p547) target = $region74
              $region71: #{tpu_custom_call.1} parent=59 // loop_body
                %v554 = vld [vmem:[%s552] sm:%s516]
                %555 = vst [vmem:[%s553] sm:%s516] %v554
                %s556 = sadd.s32 1, %s551
                %p557 = scmp.ge.s32.totalorder %s556, %s539
                %s558 = scalar_select %p557, 0, %s556
                %s559 = smul.u32 %s558, 8
                %s560 = smul.u32 %s558, 8
                %s561 = scalar_lea.vmem %s542, %s559 [#allocation2]
                %s562 = scalar_lea.vmem %s544, %s560
              $region72: #{tpu_custom_call.1} parent=59 // loop_footer
                %s548 = sadd.s32 %s546, 1
              $region73: #{tpu_custom_call.1} parent=59 // loop_footer_branch
                %545 = sbr.rel target = $region69
              $region74: #{tpu_custom_call.1} parent=59 // loop_exit
                _
            $region60: #{tpu_custom_call.1} parent=51 // pred_fallthru
              _
          $region52: #{tpu_custom_call.1} parent=47 // pred_fallthru
            _
          %613 = vnop
        $region48: #{tpu_custom_call.1} parent=35 // pred_fallthru
          _
        // Predicated region
        $region97: #{tpu_custom_call.1} parent=35 // pred_check
          %p614 = pneg %p174
        $region98: #{tpu_custom_call.1} parent=35 // pred_check_branch
          %616 = sbr.rel (%p614) target = $region100
        $region99: #{tpu_custom_call.1} parent=35 // pred_region
          %s617 = smul.u32 2, %s21
          %s618 = ssub.s32 3, %s617
          %p619 = scmp.lt.s32.totalorder %s618, 2
          %s620 = scalar_select %p619, %s618, 2
          %s621 = smul.u32 128, %s620
          %p622 = scmp.ne.s32.totalorder 0, %s621
          %s623 = smul.addr %s617, 8
          %s624 = scalar_lea.vmem %s5, %s623
          // Predicated region
          $region101: #{tpu_custom_call.1} parent=99 // pred_check
            %p625 = pneg %p622
          $region102: #{tpu_custom_call.1} parent=99 // pred_check_branch
            %627 = sbr.rel (%p625) target = $region104
          $region103: #{tpu_custom_call.1} parent=99 // pred_region
            // Predicated region
            $region105: #{tpu_custom_call.1} parent=103 // pred_check
              _
            $region106: #{tpu_custom_call.1} parent=103 // pred_check_branch
              %629 = sbr.rel (0) target = $region108
            $region107: #{tpu_custom_call.1} parent=103 // pred_region
              // Predicated region
              $region127: #{tpu_custom_call.1} parent=107 // pred_check
                _
              $region128: #{tpu_custom_call.1} parent=107 // pred_check_branch
                %681 = sbr.rel (0) target = $region130
              $region129: #{tpu_custom_call.1} parent=107 // pred_region
                %s682 = sshrl.u32 %s620, 1
                // While loop
                $region131: #{tpu_custom_call.1} parent=129 // loop_pre_header
                  _
                $region132: #{tpu_custom_call.1} parent=129 // loop_header
                  %s684 = sphi 0, %s686
                  %p685 = scmp.ge.s32.totalorder %s684, %s682
                  %s689 = sphi 0, %s698
                  %s690 = sphi %s496, %s701
                  %s691 = sphi %s624, %s702
                $region133: #{tpu_custom_call.1} parent=129 // loop_header_branch
                  %688 = sbr.rel (%p685) target = $region137
                $region134: #{tpu_custom_call.1} parent=129 // loop_body
                  %v692 = vld [vmem:[%s690] sm:$0xff]
                  %693 = vst [vmem:[%s691] sm:$0xff] %v692
                  %v694 = vld [vmem:[%s690 + $0x8] sm:$0xff]
                  %695 = vst [vmem:[%s691 + $0x8] sm:$0xff] %v694
                  %s696 = sadd.s32 1, %s689
                  %p697 = scmp.ge.s32.totalorder %s696, %s682
                  %s698 = scalar_select %p697, 0, %s696
                  %s699 = smul.u32 %s698, 16
                  %s700 = smul.u32 %s698, 16
                  %s701 = scalar_lea.vmem %s496, %s699 [#allocation3]
                  %s702 = scalar_lea.vmem %s624, %s700
                $region135: #{tpu_custom_call.1} parent=129 // loop_footer
                  %s686 = sadd.s32 %s684, 1
                $region136: #{tpu_custom_call.1} parent=129 // loop_footer_branch
                  %683 = sbr.rel target = $region132
                $region137: #{tpu_custom_call.1} parent=129 // loop_exit
                  _
                %s703 = sshrl.u32 %s620, 1
                %s704 = sand.u32 %s620, 1
                %s705 = smul.u32 %s703, 2
                %s706 = smul.u32 8, %s705
                %s707 = scalar_lea.vmem %s496, %s706 [#allocation3]
                %s708 = smul.u32 8, %s705
                %s709 = scalar_lea.vmem %s624, %s708
                // While loop
                $region138: #{tpu_custom_call.1} parent=129 // loop_pre_header
                  _
                $region139: #{tpu_custom_call.1} parent=129 // loop_header
                  %s711 = sphi 0, %s713
                  %p712 = scmp.ge.s32.totalorder %s711, %s704
                  %s716 = sphi 0, %s723
                  %s717 = sphi %s707, %s726
                  %s718 = sphi %s709, %s727
                $region140: #{tpu_custom_call.1} parent=129 // loop_header_branch
                  %715 = sbr.rel (%p712) target = $region144
                $region141: #{tpu_custom_call.1} parent=129 // loop_body
                  %v719 = vld [vmem:[%s717] sm:$0xff]
                  %720 = vst [vmem:[%s718] sm:$0xff] %v719
                  %s721 = sadd.s32 1, %s716
                  %p722 = scmp.ge.s32.totalorder %s721, %s704
                  %s723 = scalar_select %p722, 0, %s721
                  %s724 = smul.u32 %s723, 8
                  %s725 = smul.u32 %s723, 8
                  %s726 = scalar_lea.vmem %s707, %s724 [#allocation3]
                  %s727 = scalar_lea.vmem %s709, %s725
                $region142: #{tpu_custom_call.1} parent=129 // loop_footer
                  %s713 = sadd.s32 %s711, 1
                $region143: #{tpu_custom_call.1} parent=129 // loop_footer_branch
                  %710 = sbr.rel target = $region139
                $region144: #{tpu_custom_call.1} parent=129 // loop_exit
                  _
              $region130: #{tpu_custom_call.1} parent=107 // pred_fallthru
                _
              // Predicated region
              $region145: #{tpu_custom_call.1} parent=107 // pred_check
                _
              $region146: #{tpu_custom_call.1} parent=107 // pred_check_branch
                %729 = sbr.rel target = $region148
              $region147: #{tpu_custom_call.1} parent=107 // pred_region
                _
              $region148: #{tpu_custom_call.1} parent=107 // pred_fallthru
                _
            $region108: #{tpu_custom_call.1} parent=103 // pred_fallthru
              _
            // Predicated region
            $region109: #{tpu_custom_call.1} parent=103 // pred_check
              _
            $region110: #{tpu_custom_call.1} parent=103 // pred_check_branch
              %631 = sbr.rel target = $region112
            $region111: #{tpu_custom_call.1} parent=103 // pred_region
              %s633 = ssub.s32 256, 1
              %s634 = sshrl.u32 %s620, 1
              // While loop
              $region113: #{tpu_custom_call.1} parent=111 // loop_pre_header
                _
              $region114: #{tpu_custom_call.1} parent=111 // loop_header
                %s636 = sphi 0, %s638
                %p637 = scmp.ge.s32.totalorder %s636, %s634
                %s641 = sphi 0, %s650
                %s642 = sphi %s496, %s653
                %s643 = sphi %s624, %s654
              $region115: #{tpu_custom_call.1} parent=111 // loop_header_branch
                %640 = sbr.rel (%p637) target = $region119
              $region116: #{tpu_custom_call.1} parent=111 // loop_body
                %v644 = vld [vmem:[%s642] sm:%s633]
                %645 = vst [vmem:[%s643] sm:%s633] %v644
                %v646 = vld [vmem:[%s642 + $0x8] sm:%s633]
                %647 = vst [vmem:[%s643 + $0x8] sm:%s633] %v646
                %s648 = sadd.s32 1, %s641
                %p649 = scmp.ge.s32.totalorder %s648, %s634
                %s650 = scalar_select %p649, 0, %s648
                %s651 = smul.u32 %s650, 16
                %s652 = smul.u32 %s650, 16
                %s653 = scalar_lea.vmem %s496, %s651 [#allocation3]
                %s654 = scalar_lea.vmem %s624, %s652
              $region117: #{tpu_custom_call.1} parent=111 // loop_footer
                %s638 = sadd.s32 %s636, 1
              $region118: #{tpu_custom_call.1} parent=111 // loop_footer_branch
                %635 = sbr.rel target = $region114
              $region119: #{tpu_custom_call.1} parent=111 // loop_exit
                _
              %s655 = sshrl.u32 %s620, 1
              %s656 = sand.u32 %s620, 1
              %s657 = smul.u32 %s655, 2
              %s658 = smul.u32 8, %s657
              %s659 = scalar_lea.vmem %s496, %s658 [#allocation3]
              %s660 = smul.u32 8, %s657
              %s661 = scalar_lea.vmem %s624, %s660
              // While loop
              $region120: #{tpu_custom_call.1} parent=111 // loop_pre_header
                _
              $region121: #{tpu_custom_call.1} parent=111 // loop_header
                %s663 = sphi 0, %s665
                %p664 = scmp.ge.s32.totalorder %s663, %s656
                %s668 = sphi 0, %s675
                %s669 = sphi %s659, %s678
                %s670 = sphi %s661, %s679
              $region122: #{tpu_custom_call.1} parent=111 // loop_header_branch
                %667 = sbr.rel (%p664) target = $region126
              $region123: #{tpu_custom_call.1} parent=111 // loop_body
                %v671 = vld [vmem:[%s669] sm:%s633]
                %672 = vst [vmem:[%s670] sm:%s633] %v671
                %s673 = sadd.s32 1, %s668
                %p674 = scmp.ge.s32.totalorder %s673, %s656
                %s675 = scalar_select %p674, 0, %s673
                %s676 = smul.u32 %s675, 8
                %s677 = smul.u32 %s675, 8
                %s678 = scalar_lea.vmem %s659, %s676 [#allocation3]
                %s679 = scalar_lea.vmem %s661, %s677
              $region124: #{tpu_custom_call.1} parent=111 // loop_footer
                %s665 = sadd.s32 %s663, 1
              $region125: #{tpu_custom_call.1} parent=111 // loop_footer_branch
                %662 = sbr.rel target = $region121
              $region126: #{tpu_custom_call.1} parent=111 // loop_exit
                _
            $region112: #{tpu_custom_call.1} parent=103 // pred_fallthru
              _
          $region104: #{tpu_custom_call.1} parent=99 // pred_fallthru
            _
          %730 = vnop
        $region100: #{tpu_custom_call.1} parent=35 // pred_fallthru
          _
      $region36: #{tpu_custom_call.1} parent=5 // pred_fallthru
        _
      %p731 = scmp.le.s32.totalorder 2, %s12
      // Predicated region
      $region149: #{tpu_custom_call.1} parent=5 // pred_check
        %p732 = pneg %p731
      $region150: #{tpu_custom_call.1} parent=5 // pred_check_branch
        %734 = sbr.rel (%p732) target = $region152
      $region151: #{tpu_custom_call.1} parent=5 // pred_region
        %s735 = ssub.s32 %s12, 2
        // Predicated region
        $region153: #{tpu_custom_call.1} parent=151 // pred_check
          %p736 = pneg %p154
        $region154: #{tpu_custom_call.1} parent=151 // pred_check_branch
          %738 = sbr.rel (%p736) target = $region156
        $region155: #{tpu_custom_call.1} parent=151 // pred_region
          %s739 = sand.u32 %s139, 1
          %s740 = sand.u32 %s139, 1
          %s741 = smul.addr %s740, 16
          %s742 = scalar_lea.vmem [#allocation2], %s741
        $region156: #{tpu_custom_call.1} parent=151 // pred_fallthru
          _
        // Predicated region
        $region157: #{tpu_custom_call.1} parent=151 // pred_check
          %p743 = pneg %p180
        $region158: #{tpu_custom_call.1} parent=151 // pred_check_branch
          %745 = sbr.rel (%p743) target = $region160
        $region159: #{tpu_custom_call.1} parent=151 // pred_region
          %s746 = sand.u32 %s165, 1
          %s747 = sand.u32 %s165, 1
          %s748 = smul.addr %s747, 16
          %s749 = scalar_lea.vmem [#allocation3], %s748
        $region160: #{tpu_custom_call.1} parent=151 // pred_fallthru
          _
      $region152: #{tpu_custom_call.1} parent=5 // pred_fallthru
        _
    $region6: #{tpu_custom_call.1} parent=1 // loop_footer
      %s16 = sadd.s32 1, %s12
    $region7: #{tpu_custom_call.1} parent=1 // loop_footer_branch
      %11 = sbr.rel target = $region3
    $region8: #{tpu_custom_call.1} parent=1 // loop_exit
      _

</llo_original>
